<compile_context>
chip_gen: v6e
topology: v6e:2x2x1
jax: 0.10.0
libtpu: 0.0.40
codegen_flags: <defaults>
</compile_context>

<pallas_src>
import functools

import jax
import jax.numpy as jnp
from jax import lax
from jax.experimental import pallas as pl
from jax.experimental.pallas import tpu as pltpu


def _round_up(x, m):
    return (x + m - 1) // m * m


# ---------------------------------------------------------------------------
# Kernel 1: fused Q/K/V projection  (one MXU pass per row tile)
# ---------------------------------------------------------------------------
def _qkv_proj_kernel(x_ref, w_ref, q_ref, k_ref, v_ref, *, d_out_p):
    qkv = jnp.dot(x_ref[...], w_ref[...],
                  preferred_element_type=jnp.float32)        # [ts, 3*d_out_p]
    # 128-aligned splits -> lane-dense, unmasked stores.
    q_ref[...] = qkv[:, 0:d_out_p].astype(q_ref.dtype)
    k_ref[...] = qkv[:, d_out_p:2 * d_out_p].astype(k_ref.dtype)
    v_ref[...] = qkv[:, 2 * d_out_p:3 * d_out_p].astype(v_ref.dtype)


# ---------------------------------------------------------------------------
# Kernel 2: flash-style online-softmax attention on projected Q/K/V
# ---------------------------------------------------------------------------
def _flash_attn_kernel(q_ref, k_ref, v_ref, o_ref,
                       m_sc, l_sc, acc_sc, *, seq_len, kv_padded):
    kv_idx = pl.program_id(1)
    last_kv = pl.num_programs(1) - 1
    tkv = k_ref.shape[0]

    @pl.when(kv_idx == 0)
    def _():
        m_sc[...] = jnp.full_like(m_sc, -jnp.inf)
        l_sc[...] = jnp.zeros_like(l_sc)
        acc_sc[...] = jnp.zeros_like(acc_sc)

    # scores = Q @ K^T without materializing a transpose; operands stay in the
    # input dtype (bf16 if the model is bf16), accumulation in f32.
    # The 1/sqrt(d_out) softmax scale is already folded into Wq.
    s = lax.dot_general(q_ref[...], k_ref[...],
                        dimension_numbers=(((1,), (1,)), ((), ())),
                        preferred_element_type=jnp.float32)  # [TQ, TKV]

    def online_update(scores):
        m_new = jnp.maximum(m_sc[...], jnp.max(scores, axis=-1, keepdims=True))
        alpha = jnp.exp(m_sc[...] - m_new)
        p = jnp.exp(scores - m_new)
        l_sc[...] = alpha * l_sc[...] + jnp.sum(p, axis=-1, keepdims=True)
        acc_sc[...] = alpha * acc_sc[...] + jnp.dot(
            p.astype(v_ref.dtype), v_ref[...],
            preferred_element_type=jnp.float32)
        m_sc[...] = m_new

    if kv_padded:
        # Padding is confined to the last kv tile (per-axis padding, tq == tkv),
        # so interior steps skip the iota/compare/select entirely.
        @pl.when(kv_idx != last_kv)
        def _():
            online_update(s)

        @pl.when(kv_idx == last_kv)
        def _():
            col = kv_idx * tkv + lax.broadcasted_iota(jnp.int32, s.shape, 1)
            online_update(jnp.where(col < seq_len, s, -jnp.inf))
    else:
        online_update(s)

    @pl.when(kv_idx == last_kv)
    def _():
        # Exact reciprocal: l_sc is [TQ, 1], costs ~nothing, keeps parity tight.
        o_ref[...] = (acc_sc[...] *
                      pl.reciprocal(l_sc[...], approx=False)).astype(o_ref.dtype)


# ---------------------------------------------------------------------------
# Wrappers
# ---------------------------------------------------------------------------
def prepare_qkv_weights(w_query, w_key, w_value):
    """Fuse [Wq*scale | Wk | Wv] into one lane-padded weight.

    Done once at parameter-init time (hoisted out of the per-call path).
    w_*: [d_in, d_out] (transposed nn.Linear weights).
    """
    d_in, d_out = w_query.shape
    d_in_p = _round_up(d_in, 128)
    d_out_p = _round_up(d_out, 128)
    scale = 1.0 / (d_out ** 0.5)
    w = jnp.zeros((d_in_p, 3 * d_out_p), w_query.dtype)
    w = w.at[:d_in, 0:d_out].set(w_query * scale)
    w = w.at[:d_in, d_out_p:d_out_p + d_out].set(w_key)
    w = w.at[:d_in, 2 * d_out_p:2 * d_out_p + d_out].set(w_value)
    return w, d_out


def self_attention_v2(x, w_fused, d_out, *, block_seq=256):
    """x: [T, d_in]; w_fused: lane-padded [d_in_p, 3*d_out_p] from prepare_qkv_weights."""
    T, d_in = x.shape
    d_in_p = w_fused.shape[0]
    d_out_p = w_fused.shape[1] // 3

    # Single sequence tile for the q and kv axes; per-axis padding bounded to
    # < one tile, so the kv mask lives only in the last tile.
    ts = min(block_seq, _round_up(T, 8))
    t_pad = _round_up(T, ts)
    n_seq = t_pad // ts

    if (t_pad, d_in_p) == (T, d_in):
        x_p = x
    else:
        x_p = jnp.zeros((t_pad, d_in_p), x.dtype).at[:T, :d_in].set(x)

    # ---- Pass 1: project Q/K/V exactly once (no re-projection per q tile).
    q, k, v = pl.pallas_call(
        functools.partial(_qkv_proj_kernel, d_out_p=d_out_p),
        out_shape=(jax.ShapeDtypeStruct((t_pad, d_out_p), x.dtype),
                   jax.ShapeDtypeStruct((t_pad, d_out_p), x.dtype),
                   jax.ShapeDtypeStruct((t_pad, d_out_p), x.dtype)),
        grid_spec=pltpu.PrefetchScalarGridSpec(
            num_scalar_prefetch=0,
            grid=(n_seq,),
            in_specs=[
                pl.BlockSpec((ts, d_in_p), lambda i: (i, 0)),          # x rows
                pl.BlockSpec((d_in_p, 3 * d_out_p), lambda i: (0, 0)),  # fused W
            ],
            out_specs=(
                pl.BlockSpec((ts, d_out_p), lambda i: (i, 0)),
                pl.BlockSpec((ts, d_out_p), lambda i: (i, 0)),
                pl.BlockSpec((ts, d_out_p), lambda i: (i, 0)),
            ),
        ),
        compiler_params=pltpu.CompilerParams(
            dimension_semantics=("parallel",)),
    )(x_p, w_fused)

    # ---- Pass 2: flash attention over the projected tensors.
    kernel = functools.partial(_flash_attn_kernel,
                               seq_len=T, kv_padded=(t_pad != T))
    out_p = pl.pallas_call(
        kernel,
        out_shape=jax.ShapeDtypeStruct((t_pad, d_out_p), x.dtype),
        grid_spec=pltpu.PrefetchScalarGridSpec(
            num_scalar_prefetch=0,
            grid=(n_seq, n_seq),
            in_specs=[
                pl.BlockSpec((ts, d_out_p), lambda qi, ki: (qi, 0)),   # Q
                pl.BlockSpec((ts, d_out_p), lambda qi, ki: (ki, 0)),   # K
                pl.BlockSpec((ts, d_out_p), lambda qi, ki: (ki, 0)),   # V
            ],
            out_specs=pl.BlockSpec((ts, d_out_p), lambda qi, ki: (qi, 0)),
            scratch_shapes=[
                pltpu.VMEM((ts, 1), jnp.float32),        # running max
                pltpu.VMEM((ts, 1), jnp.float32),        # running denom
                pltpu.VMEM((ts, d_out_p), jnp.float32),  # output accumulator
            ],
        ),
        compiler_params=pltpu.CompilerParams(
            dimension_semantics=("parallel", "arbitrary")),
    )(q, k, v)

    return out_p[:T, :d_out]


def _reference(x, wq, wk, wv):
    q = x @ wq
    k = x @ wk
    v = x @ wv
    scores = q @ k.T
    w = jax.nn.softmax(scores / (k.shape[-1] ** 0.5), axis=-1)
    return w @ v


if __name__ == "__main__":
    # Same inputs as the PyTorch snippet: [6, 3] float32
    inputs = jnp.array(
        [
            [0.43, 0.15, 0.89],
            [0.55, 0.87, 0.66],
            [0.57, 0.85, 0.64],
            [0.22, 0.58, 0.33],
            [0.77, 0.25, 0.10],
            [0.05, 0.80, 0.55],
        ],
        dtype=jnp.float32,
    )

    d_in = inputs.shape[1]   # 3
    d_out = 2

    # Deterministic init mimicking nn.Linear uniform(-1/sqrt(d_in), 1/sqrt(d_in)),
    # stored as [d_in, d_out] (transposed vs PyTorch's [d_out, d_in]).
    key = jax.random.PRNGKey(0)
    kq, kk, kvw = jax.random.split(key, 3)
    bound = 1.0 / (d_in ** 0.5)
    w_query = jax.random.uniform(kq, (d_in, d_out), jnp.float32, -bound, bound)
    w_key = jax.random.uniform(kk, (d_in, d_out), jnp.float32, -bound, bound)
    w_value = jax.random.uniform(kvw, (d_in, d_out), jnp.float32, -bound, bound)

    # Weight fusion/padding done once at "parameter init" time.
    w_fused, d_out_real = prepare_qkv_weights(w_query, w_key, w_value)

    out = self_attention_v2(inputs, w_fused, d_out_real)
    out = jax.block_until_ready(out)

    ref = _reference(inputs, w_query, w_key, w_value)
    assert out.shape == (inputs.shape[0], d_out)
    assert jnp.allclose(out, ref, atol=1e-4, rtol=1e-4), (out, ref)

    print("KERNEL_OK")
</pallas_src>

<mosaic_0001>
module attributes {stable_mosaic.version = 11 : i64} {
  func.func @_qkv_proj_kernel(%arg0: i32, %arg1: memref<8x128xf32, #tpu.memory_space<vmem>>, %arg2: memref<128x384xf32, #tpu.memory_space<vmem>>, %arg3: memref<8x128xf32, #tpu.memory_space<vmem>>, %arg4: memref<8x128xf32, #tpu.memory_space<vmem>>, %arg5: memref<8x128xf32, #tpu.memory_space<vmem>>) attributes {dimension_semantics = [#tpu.dimension_semantics<parallel>], iteration_bounds = array<i64: 1>, scalar_prefetch = 0 : i64, scratch_operands = 0 : i64, tpu.core_type = #tpu.core_type<tc>, window_params = [{transform_indices = @transform_0, window_bounds = array<i64: 8, 128>}, {pipeline_mode = #tpu.pipeline_mode<synchronous>, transform_indices = @transform_1, window_bounds = array<i64: 128, 384>}, {transform_indices = @transform_2, window_bounds = array<i64: 8, 128>}, {transform_indices = @transform_3, window_bounds = array<i64: 8, 128>}, {transform_indices = @transform_4, window_bounds = array<i64: 8, 128>}]} {
    %c0 = arith.constant 0 : index
    %c0_0 = arith.constant 0 : index
    %0 = vector.load %arg1[%c0, %c0_0] : memref<8x128xf32, #tpu.memory_space<vmem>>, vector<8x128xf32>
    %c0_1 = arith.constant 0 : index
    %c0_2 = arith.constant 0 : index
    %1 = vector.load %arg2[%c0_1, %c0_2] : memref<128x384xf32, #tpu.memory_space<vmem>>, vector<128x384xf32>
    %cst = arith.constant dense<0.000000e+00> : vector<8x384xf32>
    %2 = tpu.matmul %0, %1, %cst {dimension_numbers = #tpu.dot_dimension_numbers<[1], [0], [0], [1], [0, 0, 1, 1], [], []>} : vector<8x128xf32>, vector<128x384xf32>, vector<8x384xf32> -> vector<8x384xf32>
    %3 = vector.extract_strided_slice %2 {offsets = [0, 0], sizes = [8, 128], strides = [1, 1]} : vector<8x384xf32> to vector<8x128xf32>
    %c0_3 = arith.constant 0 : index
    %c0_4 = arith.constant 0 : index
    %4 = vector.load %arg3[%c0_3, %c0_4] : memref<8x128xf32, #tpu.memory_space<vmem>>, vector<8x128xf32>
    tpu.vector_store %arg3[%c0_3, %c0_4], %3 {strides = array<i32>} : memref<8x128xf32, #tpu.memory_space<vmem>>, vector<8x128xf32>,
    %5 = vector.extract_strided_slice %2 {offsets = [0, 128], sizes = [8, 128], strides = [1, 1]} : vector<8x384xf32> to vector<8x128xf32>
    %c0_5 = arith.constant 0 : index
    %c0_6 = arith.constant 0 : index
    %6 = vector.load %arg4[%c0_5, %c0_6] : memref<8x128xf32, #tpu.memory_space<vmem>>, vector<8x128xf32>
    tpu.vector_store %arg4[%c0_5, %c0_6], %5 {strides = array<i32>} : memref<8x128xf32, #tpu.memory_space<vmem>>, vector<8x128xf32>,
    %7 = vector.extract_strided_slice %2 {offsets = [0, 256], sizes = [8, 128], strides = [1, 1]} : vector<8x384xf32> to vector<8x128xf32>
    %c0_7 = arith.constant 0 : index
    %c0_8 = arith.constant 0 : index
    %8 = vector.load %arg5[%c0_7, %c0_8] : memref<8x128xf32, #tpu.memory_space<vmem>>, vector<8x128xf32>
    tpu.vector_store %arg5[%c0_7, %c0_8], %7 {strides = array<i32>} : memref<8x128xf32, #tpu.memory_space<vmem>>, vector<8x128xf32>,
    return
  }
  func.func @transform_0(%arg0: i32) -> (i32, i32) {
    %c0_i32 = arith.constant 0 : i32
    %c0_i32_0 = arith.constant 0 : i32
    return %arg0, %c0_i32 : i32, i32
  }
  func.func @transform_1(%arg0: i32) -> (i32, i32) {
    %c0_i32 = arith.constant 0 : i32
    %c0_i32_0 = arith.constant 0 : i32
    %c0_i32_1 = arith.constant 0 : i32
    return %c0_i32, %c0_i32_0 : i32, i32
  }
  func.func @transform_2(%arg0: i32) -> (i32, i32) {
    %c0_i32 = arith.constant 0 : i32
    %c0_i32_0 = arith.constant 0 : i32
    return %arg0, %c0_i32 : i32, i32
  }
  func.func @transform_3(%arg0: i32) -> (i32, i32) {
    %c0_i32 = arith.constant 0 : i32
    %c0_i32_0 = arith.constant 0 : i32
    return %arg0, %c0_i32 : i32, i32
  }
  func.func @transform_4(%arg0: i32) -> (i32, i32) {
    %c0_i32 = arith.constant 0 : i32
    %c0_i32_0 = arith.constant 0 : i32
    return %arg0, %c0_i32 : i32, i32
  }
}

</mosaic_0001>

<llo_original>
// kernel: tpu_custom_call.1
$region0: #{tpu_custom_call.1}
  #allocation0 [shape = 'u32[]', space=smem, size = 0x4, offset = 0x4, fixed_abs, tag = 'smem constant byte address 0x4 - core index']
  #allocation1 [shape = 'u32[144,128]{1,0:T(1,128)}', space=vmem, size = 0x12000, scoped, tag = 'internal scratch']
  %s0 = inlined_call_operand.hbm [shape: f32[8,128], index: 0, kind: input, shape index: {}]
  %s1 = inlined_call_operand.hbm [shape: f32[128,384], index: 1, kind: input, shape index: {}]
  %s2 = inlined_call_operand.hbm [shape: f32[8,128], index: 2, kind: output, shape index: {0}]
  %s3 = inlined_call_operand.hbm [shape: f32[8,128], index: 3, kind: output, shape index: {1}]
  %s4 = inlined_call_operand.hbm [shape: f32[8,128], index: 4, kind: output, shape index: {2}]
  %5 = xla_tuple %s2, %s3, %s4
  %s6 = sld [smem:[#allocation0]]
  $region42: #{tpu_custom_call.1} parent=0
    _
  %s8 = ssub.s32 1, %s6
  %s9 = scalar_select 0, %s8, %s6
  $region1: #{tpu_custom_call.1} parent=0
    #allocation2 [shape = 'u8[4096]{0}', space=vmem, size = 0x1000, scoped, tag = 'input window, operand 0, single buffered']
    #allocation3 [shape = 's32[1]{0}', space=sflag, size = 0x4, scoped, tag = 'scoped memory for tpu_custom_call.1']
    #allocation4 [shape = 's32[1]{0}', space=sflag, size = 0x4, scoped, tag = 'scoped memory for tpu_custom_call.1']
    #allocation5 [shape = 'u8[196608]{0}', space=vmem, size = 0x30000, scoped, tag = 'input window, operand 1, single buffered']
    #allocation6 [shape = 's32[1]{0}', space=sflag, size = 0x4, scoped, tag = 'scoped memory for tpu_custom_call.1']
    #allocation7 [shape = 'u8[4096]{0}', space=vmem, size = 0x1000, scoped, tag = 'output window, operand 0, single buffered']
    #allocation8 [shape = 'u8[4096]{0}', space=vmem, size = 0x1000, scoped, tag = 'output window, operand 1, single buffered']
    #allocation9 [shape = 's32[1]{0}', space=sflag, size = 0x4, scoped, tag = 'scoped memory for tpu_custom_call.1']
    #allocation10 [shape = 'u8[4096]{0}', space=vmem, size = 0x1000, scoped, tag = 'output window, operand 2, single buffered']
    %10 = vsyncpa [#allocation3], 0
    %11 = vsyncpa [#allocation6], 0
    %12 = vsyncpa [#allocation4], 0
    %13 = vsyncpa [#allocation9], 0
    // Predicated region
    $region2: #{tpu_custom_call.1} parent=1 // pred_check
      _
    $region3: #{tpu_custom_call.1} parent=1 // pred_check_branch
      %15 = sbr.rel (0) target = $region5
    $region4: #{tpu_custom_call.1} parent=1 // pred_region
      %s17 = ssub.s32 128, 128
      %18 = vsyncadd [#allocation3], %s17
      %s20 = sshll.u32 [#allocation2], 4
      %s21 = int_to_ptr.vmem [resolvable:$true] %s20
      %23 = dma.hbm_to_vmem [thread:$0]  %s0, 128, %s21, [#allocation3]
    $region5: #{tpu_custom_call.1} parent=1 // pred_fallthru
      _
    // Predicated region
    $region6: #{tpu_custom_call.1} parent=1 // pred_check
      _
    $region7: #{tpu_custom_call.1} parent=1 // pred_check_branch
      %25 = sbr.rel (0) target = $region9
    $region8: #{tpu_custom_call.1} parent=1 // pred_region
      %s27 = ssub.s32 6144, 6144
      %28 = vsyncadd [#allocation6], %s27
      %s29 = sshll.u32 [#allocation5], 4
      %s30 = int_to_ptr.vmem [resolvable:$true] %s29
      %35 = dma.hbm_to_vmem [thread:$0]  %s1, 6144, %s30, [#allocation6], 384, 384, 24
    $region9: #{tpu_custom_call.1} parent=1 // pred_fallthru
      _
    // Predicated region
    $region10: #{tpu_custom_call.1} parent=1 // pred_check
      _
    $region11: #{tpu_custom_call.1} parent=1 // pred_check_branch
      %37 = sbr.rel (0) target = $region13
    $region12: #{tpu_custom_call.1} parent=1 // pred_region
      %38 = dma.done [#allocation3], 128
    $region13: #{tpu_custom_call.1} parent=1 // pred_fallthru
      _
    // Predicated region
    $region14: #{tpu_custom_call.1} parent=1 // pred_check
      _
    $region15: #{tpu_custom_call.1} parent=1 // pred_check_branch
      %40 = sbr.rel (0) target = $region17
    $region16: #{tpu_custom_call.1} parent=1 // pred_region
      %41 = dma.done [#allocation6], 6144
    $region17: #{tpu_custom_call.1} parent=1 // pred_fallthru
      _
    %v42 = vld [vmem:[#allocation2] sm:$0xff]
    %v43 = vld [vmem:[#allocation5] sm:$0xff]
    %v44 = vld [vmem:[#allocation5 + $0x8] sm:$0xff]
    %v45 = vld [vmem:[#allocation5 + $0x10] sm:$0xff]
    %v46 = vld [vmem:[#allocation5 + $0x18] sm:$0xff]
    %v47 = vld [vmem:[#allocation5 + $0x20] sm:$0xff]
    %v48 = vld [vmem:[#allocation5 + $0x28] sm:$0xff]
    %v49 = vld [vmem:[#allocation5 + $0x30] sm:$0xff]
    %v50 = vld [vmem:[#allocation5 + $0x38] sm:$0xff]
    %v51 = vld [vmem:[#allocation5 + $0x40] sm:$0xff]
    %v52 = vld [vmem:[#allocation5 + $0x48] sm:$0xff]
    %v53 = vld [vmem:[#allocation5 + $0x50] sm:$0xff]
    %v54 = vld [vmem:[#allocation5 + $0x58] sm:$0xff]
    %v55 = vld [vmem:[#allocation5 + $0x60] sm:$0xff]
    %v56 = vld [vmem:[#allocation5 + $0x68] sm:$0xff]
    %v57 = vld [vmem:[#allocation5 + $0x70] sm:$0xff]
    %v58 = vld [vmem:[#allocation5 + $0x78] sm:$0xff]
    %v59 = vld [vmem:[#allocation5 + $0x80] sm:$0xff]
    %v60 = vld [vmem:[#allocation5 + $0x88] sm:$0xff]
    %v61 = vld [vmem:[#allocation5 + $0x90] sm:$0xff]
    %v62 = vld [vmem:[#allocation5 + $0x98] sm:$0xff]
    %v63 = vld [vmem:[#allocation5 + $0xa0] sm:$0xff]
    %v64 = vld [vmem:[#allocation5 + $0xa8] sm:$0xff]
    %v65 = vld [vmem:[#allocation5 + $0xb0] sm:$0xff]
    %v66 = vld [vmem:[#allocation5 + $0xb8] sm:$0xff]
    %v67 = vld [vmem:[#allocation5 + $0xc0] sm:$0xff]
    %v68 = vld [vmem:[#allocation5 + $0xc8] sm:$0xff]
    %v69 = vld [vmem:[#allocation5 + $0xd0] sm:$0xff]
    %v70 = vld [vmem:[#allocation5 + $0xd8] sm:$0xff]
    %v71 = vld [vmem:[#allocation5 + $0xe0] sm:$0xff]
    %v72 = vld [vmem:[#allocation5 + $0xe8] sm:$0xff]
    %v73 = vld [vmem:[#allocation5 + $0xf0] sm:$0xff]
    %v74 = vld [vmem:[#allocation5 + $0xf8] sm:$0xff]
    %v75 = vld [vmem:[#allocation5 + $0x100] sm:$0xff]
    %v76 = vld [vmem:[#allocation5 + $0x108] sm:$0xff]
    %v77 = vld [vmem:[#allocation5 + $0x110] sm:$0xff]
    %v78 = vld [vmem:[#allocation5 + $0x118] sm:$0xff]
    %v79 = vld [vmem:[#allocation5 + $0x120] sm:$0xff]
    %v80 = vld [vmem:[#allocation5 + $0x128] sm:$0xff]
    %v81 = vld [vmem:[#allocation5 + $0x130] sm:$0xff]
    %v82 = vld [vmem:[#allocation5 + $0x138] sm:$0xff]
    %v83 = vld [vmem:[#allocation5 + $0x140] sm:$0xff]
    %v84 = vld [vmem:[#allocation5 + $0x148] sm:$0xff]
    %v85 = vld [vmem:[#allocation5 + $0x150] sm:$0xff]
    %v86 = vld [vmem:[#allocation5 + $0x158] sm:$0xff]
    %v87 = vld [vmem:[#allocation5 + $0x160] sm:$0xff]
    %v88 = vld [vmem:[#allocation5 + $0x168] sm:$0xff]
    %v89 = vld [vmem:[#allocation5 + $0x170] sm:$0xff]
    %v90 = vld [vmem:[#allocation5 + $0x178] sm:$0xff]
    %91 = vmatprep.subr.mxu0 %v89
    %92 = vmatpush1.msra.mxu0 %v88
    %93 = vmatprep.subr.mxu0 %v86
    %94 = vmatpush1.msra.mxu0 %v85
    %95 = vmatprep.subr.mxu0 %v83
    %96 = vmatpush1.msra.mxu0 %v82
    %97 = vmatprep.subr.mxu0 %v80
    %98 = vmatpush1.msra.mxu0 %v79
    %99 = vmatprep.subr.mxu0 %v77
    %100 = vmatpush1.msra.mxu0 %v76
    %101 = vmatprep.subr.mxu0 %v74
    %102 = vmatpush1.msra.mxu0 %v73
    %103 = vmatprep.subr.mxu0 %v71
    %104 = vmatpush1.msra.mxu0 %v70
    %105 = vmatprep.subr.mxu0 %v68
    %106 = vmatpush1.msra.mxu0 %v67
    %107 = vmatprep.subr.mxu0 %v65
    %108 = vmatpush1.msra.mxu0 %v64
    %109 = vmatprep.subr.mxu0 %v62
    %110 = vmatpush1.msra.mxu0 %v61
    %111 = vmatprep.subr.mxu0 %v59
    %112 = vmatpush1.msra.mxu0 %v58
    %113 = vmatprep.subr.mxu0 %v56
    %114 = vmatpush1.msra.mxu0 %v55
    %115 = vmatprep.subr.mxu0 %v53
    %116 = vmatpush1.msra.mxu0 %v52
    %117 = vmatprep.subr.mxu0 %v50
    %118 = vmatpush1.msra.mxu0 %v49
    %119 = vmatprep.subr.mxu0 %v47
    %120 = vmatpush1.msra.mxu0 %v46
    %121 = vmatprep.subr.mxu0 %v44
    %122 = vmatpush1.msra.mxu0 %v43
    %123 = vmatprep.subr.mxu0 0.0
    %124 = vmatpush2.msra.mxu0 0.0
    %125 = vmatprep.subr.mxu0 0.0
    %126 = vmatpush2.msra.mxu0 0.0
    %127 = vmatprep.subr.mxu0 0.0
    %128 = vmatpush2.msra.mxu0 0.0
    %129 = vmatprep.subr.mxu0 0.0
    %130 = vmatpush2.msra.mxu0 0.0
    %131 = vmatprep.subr.mxu0 0.0
    %132 = vmatpush2.msra.mxu0 0.0
    %133 = vmatprep.subr.mxu0 0.0
    %134 = vmatpush2.msra.mxu0 0.0
    %135 = vmatprep.subr.mxu0 0.0
    %136 = vmatpush2.msra.mxu0 0.0
    %137 = vmatprep.subr.mxu0 0.0
    %138 = vmatpush2.msra.mxu0 0.0
    %139 = vmatprep.subr.mxu0 0.0
    %140 = vmatpush2.msra.mxu0 0.0
    %141 = vmatprep.subr.mxu0 0.0
    %142 = vmatpush2.msra.mxu0 0.0
    %143 = vmatprep.subr.mxu0 0.0
    %144 = vmatpush2.msra.mxu0 0.0
    %145 = vmatprep.subr.mxu0 0.0
    %146 = vmatpush2.msra.mxu0 0.0
    %147 = vmatprep.subr.mxu0 0.0
    %148 = vmatpush2.msra.mxu0 0.0
    %149 = vmatprep.subr.mxu0 0.0
    %150 = vmatpush2.msra.mxu0 0.0
    %151 = vmatprep.subr.mxu0 0.0
    %152 = vmatpush2.msra.mxu0 0.0
    %153 = vmatprep.subr.mxu0 0.0
    %154 = vmatpush2.msra.mxu0 0.0
    %155 = vmatprep.mubr.f32.mxu0 0.0
    %156 = vmatmul.mubr.f32.gmra.mxu0 %v42
    %v157 = vpop.f32.mrf.mxu0
    %v158 = vadd.f32 0.0, %v157
    %v159 = vpop.f32.mrf.mxu0
    %v160 = vadd.f32 0.0, %v159
    %161 = vdwg.mxu0
    %162 = vmatprep.subr.mxu0 0.0
    %163 = vmatpush1.msra.mxu0 %v90
    %164 = vmatprep.subr.mxu0 0.0
    %165 = vmatpush1.msra.mxu0 %v87
    %166 = vmatprep.subr.mxu0 0.0
    %167 = vmatpush1.msra.mxu0 %v84
    %168 = vmatprep.subr.mxu0 0.0
    %169 = vmatpush1.msra.mxu0 %v81
    %170 = vmatprep.subr.mxu0 0.0
    %171 = vmatpush1.msra.mxu0 %v78
    %172 = vmatprep.subr.mxu0 0.0
    %173 = vmatpush1.msra.mxu0 %v75
    %174 = vmatprep.subr.mxu0 0.0
    %175 = vmatpush1.msra.mxu0 %v72
    %176 = vmatprep.subr.mxu0 0.0
    %177 = vmatpush1.msra.mxu0 %v69
    %178 = vmatprep.subr.mxu0 0.0
    %179 = vmatpush1.msra.mxu0 %v66
    %180 = vmatprep.subr.mxu0 0.0
    %181 = vmatpush1.msra.mxu0 %v63
    %182 = vmatprep.subr.mxu0 0.0
    %183 = vmatpush1.msra.mxu0 %v60
    %184 = vmatprep.subr.mxu0 0.0
    %185 = vmatpush1.msra.mxu0 %v57
    %186 = vmatprep.subr.mxu0 0.0
    %187 = vmatpush1.msra.mxu0 %v54
    %188 = vmatprep.subr.mxu0 0.0
    %189 = vmatpush1.msra.mxu0 %v51
    %190 = vmatprep.subr.mxu0 0.0
    %191 = vmatpush1.msra.mxu0 %v48
    %192 = vmatprep.subr.mxu0 0.0
    %193 = vmatpush1.msra.mxu0 %v45
    %194 = vmatprep.subr.mxu0 0.0
    %195 = vmatpush2.msra.mxu0 0.0
    %196 = vmatprep.subr.mxu0 0.0
    %197 = vmatpush2.msra.mxu0 0.0
    %198 = vmatprep.subr.mxu0 0.0
    %199 = vmatpush2.msra.mxu0 0.0
    %200 = vmatprep.subr.mxu0 0.0
    %201 = vmatpush2.msra.mxu0 0.0
    %202 = vmatprep.subr.mxu0 0.0
    %203 = vmatpush2.msra.mxu0 0.0
    %204 = vmatprep.subr.mxu0 0.0
    %205 = vmatpush2.msra.mxu0 0.0
    %206 = vmatprep.subr.mxu0 0.0
    %207 = vmatpush2.msra.mxu0 0.0
    %208 = vmatprep.subr.mxu0 0.0
    %209 = vmatpush2.msra.mxu0 0.0
    %210 = vmatprep.subr.mxu0 0.0
    %211 = vmatpush2.msra.mxu0 0.0
    %212 = vmatprep.subr.mxu0 0.0
    %213 = vmatpush2.msra.mxu0 0.0
    %214 = vmatprep.subr.mxu0 0.0
    %215 = vmatpush2.msra.mxu0 0.0
    %216 = vmatprep.subr.mxu0 0.0
    %217 = vmatpush2.msra.mxu0 0.0
    %218 = vmatprep.subr.mxu0 0.0
    %219 = vmatpush2.msra.mxu0 0.0
    %220 = vmatprep.subr.mxu0 0.0
    %221 = vmatpush2.msra.mxu0 0.0
    %222 = vmatprep.subr.mxu0 0.0
    %223 = vmatpush2.msra.mxu0 0.0
    %224 = vmatprep.subr.mxu0 0.0
    %225 = vmatpush2.msra.mxu0 0.0
    %226 = vmatprep.mubr.f32.mxu0 0.0
    %227 = vmatmul.mubr.f32.gmra.mxu0 %v42
    %v228 = vpop.f32.mrf.mxu0
    %v229 = vadd.f32 0.0, %v228
    %v230 = vpop.f32.mrf.mxu0
    %231 = vdwg.mxu0
    %232 = vst [vmem:[#allocation7] sm:$0xff] %v158
    %233 = vst [vmem:[#allocation8] sm:$0xff] %v160
    %234 = vst [vmem:[#allocation10] sm:$0xff] %v229
    // Predicated region
    $region18: #{tpu_custom_call.1} parent=1 // pred_check
      _
    $region19: #{tpu_custom_call.1} parent=1 // pred_check_branch
      %236 = sbr.rel (0) target = $region21
    $region20: #{tpu_custom_call.1} parent=1 // pred_region
      %s238 = ssub.s32 128, 128
      %239 = vsyncadd [#allocation4], %s238
      %s241 = sshll.u32 [#allocation7], 4
      %s242 = int_to_ptr.vmem [resolvable:$true] %s241
      %244 = dma.vmem_to_hbm [thread:$0]  %s242, 128, %s2, [#allocation4]
    $region21: #{tpu_custom_call.1} parent=1 // pred_fallthru
      _
    // Predicated region
    $region22: #{tpu_custom_call.1} parent=1 // pred_check
      _
    $region23: #{tpu_custom_call.1} parent=1 // pred_check_branch
      %246 = sbr.rel (0) target = $region25
    $region24: #{tpu_custom_call.1} parent=1 // pred_region
      %s248 = ssub.s32 128, 128
      %249 = vsyncadd [#allocation9], %s248
      %s251 = sshll.u32 [#allocation8], 4
      %s252 = int_to_ptr.vmem [resolvable:$true] %s251
      %254 = dma.vmem_to_hbm [thread:$0]  %s252, 128, %s3, [#allocation9]
    $region25: #{tpu_custom_call.1} parent=1 // pred_fallthru
      _
    // Predicated region
    $region26: #{tpu_custom_call.1} parent=1 // pred_check
      _
    $region27: #{tpu_custom_call.1} parent=1 // pred_check_branch
      %256 = sbr.rel (0) target = $region29
    $region28: #{tpu_custom_call.1} parent=1 // pred_region
      %s258 = ssub.s32 128, 128
      %259 = vsyncadd [#allocation9], %s258
      %s261 = sshll.u32 [#allocation10], 4
      %s262 = int_to_ptr.vmem [resolvable:$true] %s261
      %264 = dma.vmem_to_hbm [thread:$0]  %s262, 128, %s4, [#allocation9]
    $region29: #{tpu_custom_call.1} parent=1 // pred_fallthru
      _
    // Predicated region
    $region30: #{tpu_custom_call.1} parent=1 // pred_check
      _
    $region31: #{tpu_custom_call.1} parent=1 // pred_check_branch
      %266 = sbr.rel (0) target = $region33
    $region32: #{tpu_custom_call.1} parent=1 // pred_region
      %267 = dma.done [#allocation4], 128
    $region33: #{tpu_custom_call.1} parent=1 // pred_fallthru
      _
    // Predicated region
    $region34: #{tpu_custom_call.1} parent=1 // pred_check
      _
    $region35: #{tpu_custom_call.1} parent=1 // pred_check_branch
      %269 = sbr.rel (0) target = $region37
    $region36: #{tpu_custom_call.1} parent=1 // pred_region
      %270 = dma.done [#allocation9], 128
    $region37: #{tpu_custom_call.1} parent=1 // pred_fallthru
      _
    // Predicated region
    $region38: #{tpu_custom_call.1} parent=1 // pred_check
      _
    $region39: #{tpu_custom_call.1} parent=1 // pred_check_branch
      %272 = sbr.rel (0) target = $region41
    $region40: #{tpu_custom_call.1} parent=1 // pred_region
      %273 = dma.done [#allocation9], 128
    $region41: #{tpu_custom_call.1} parent=1 // pred_fallthru
      _
    %274 = vsyncpa [#allocation3], 1
    %275 = vsyncpa [#allocation6], 1
    %276 = vsyncpa [#allocation4], 1
    %277 = vsyncpa [#allocation9], 1

</llo_original>
